<compile_context>
chip_gen: v7x
topology: tpu7x:2x2x1
jax: 0.10.0
libtpu: 0.0.40
codegen_flags: <defaults>
</compile_context>

<pallas_src>
import functools

import jax
import jax.numpy as jnp
from jax.experimental import pallas as pl
from jax.experimental.pallas import tpu as pltpu


def _round_up(x, m):
    return ((x + m - 1) // m) * m


def _log_sigmoid(x):
    # numerically stable logsigmoid(x) = min(x, 0) - log1p(exp(-|x|))
    return jnp.minimum(x, 0.0) - jnp.log1p(jnp.exp(-jnp.abs(x)))


def _sgns_loss_kernel(in_ref, ctx_ref, out_ref, *, num_pos):
    """One batch tile.

    in_ref  : [TB, E]        center-word embeddings
    ctx_ref : [TB, PN, E]    concat(pos, neg) context embeddings (PN = P + N)
    out_ref : [1, TB]        per-example loss, batch on the lane axis
    """
    inp = in_ref[...]
    ctx = ctx_ref[...]
    if inp.dtype != jnp.float32:
        inp = inp.astype(jnp.float32)
    if ctx.dtype != jnp.float32:
        ctx = ctx.astype(jnp.float32)

    # Single multiply + lane reduce for pos and neg together: [TB, PN]
    score = jnp.sum(ctx * inp[:, None, :], axis=-1)

    # First `num_pos` columns score against +input, the rest against -input.
    col = jax.lax.broadcasted_iota(jnp.int32, score.shape, 1)
    signed = jnp.where(col < num_pos, score, -score)

    log_sig = _log_sigmoid(signed)                       # [TB, PN]  (EUP exp/log1p)
    loss = -jnp.sum(log_sig, axis=1)                     # [TB]
    out_ref[...] = loss[None, :]                         # [1, TB] lane-dense store


def sgns_loss(in_emb, ctx_emb, num_pos, *, vmem_limit_bytes=32 * 1024 * 1024):
    """in_emb: [B, E], ctx_emb: [B, P+N, E] -> loss [B]."""
    B, E = in_emb.shape
    _, PN, _ = ctx_emb.shape
    itemsize = jnp.dtype(in_emb.dtype).itemsize

    # --- choose a batch tile whose double-buffered inputs fit scoped VMEM ---
    per_row_bytes = (1 + PN) * E * itemsize
    budget = vmem_limit_bytes // 2                  # headroom for temporaries/output
    tb = max(8, budget // (2 * per_row_bytes))      # x2: double buffering
    tb = min(tb, 1024)
    tb = (tb // 128) * 128 if tb >= 128 else (tb // 8) * 8
    tb = max(8, min(tb, _round_up(B, 8)))           # don't tile far past the batch

    b_pad = _round_up(B, tb)
    if b_pad != B:
        pad = b_pad - B
        in_emb = jnp.pad(in_emb, ((0, pad), (0, 0)))
        ctx_emb = jnp.pad(ctx_emb, ((0, pad), (0, 0), (0, 0)))
    n_tiles = b_pad // tb

    cost = pl.CostEstimate(
        flops=2 * b_pad * PN * E + 4 * b_pad * PN,
        transcendentals=2 * b_pad * PN,             # exp + log1p per score
        bytes_accessed=b_pad * (1 + PN) * E * itemsize + b_pad * 4,
    )

    out = pl.pallas_call(
        functools.partial(_sgns_loss_kernel, num_pos=int(num_pos)),
        out_shape=jax.ShapeDtypeStruct((n_tiles, tb), jnp.float32),
        grid=(n_tiles,),
        in_specs=[
            pl.BlockSpec((tb, E), lambda i: (i, 0)),
            pl.BlockSpec((tb, PN, E), lambda i: (i, 0, 0)),
        ],
        out_specs=pl.BlockSpec((1, tb), lambda i: (i, 0)),
        compiler_params=pltpu.CompilerParams(
            dimension_semantics=("parallel",),
            vmem_limit_bytes=vmem_limit_bytes,
        ),
        cost_estimate=cost,
    )(in_emb, ctx_emb)

    return out.reshape(-1)[:B]


class EmbeddingModel:
    """JAX/Pallas port of the PyTorch EmbeddingModel (skip-gram w/ neg sampling)."""

    def __init__(self, vocab_size, embed_size, key):
        self.vocab_size = vocab_size
        self.embed_size = embed_size
        initrange = 0.5 / embed_size
        k_in, k_out = jax.random.split(key)
        self.in_embed = jax.random.uniform(
            k_in, (vocab_size, embed_size), jnp.float32,
            minval=-initrange, maxval=initrange)
        self.out_embed = jax.random.uniform(
            k_out, (vocab_size, embed_size), jnp.float32,
            minval=-initrange, maxval=initrange)

    def forward(self, input_labels, pos_labels, neg_labels):
        # One gather over the concatenated (pos, neg) labels so the kernel
        # consumes a single contiguous [B, P+N, E] context tensor.
        ctx_labels = jnp.concatenate([pos_labels, neg_labels], axis=1)
        in_emb = self.in_embed[input_labels]          # [B, E]
        ctx_emb = self.out_embed[ctx_labels]          # [B, P+N, E]
        return sgns_loss(in_emb, ctx_emb, num_pos=pos_labels.shape[1])

    def input_embeddings(self):
        return jax.device_get(self.in_embed)


def _reference_forward(model, input_labels, pos_labels, neg_labels):
    # pure-JAX reference mirroring the PyTorch forward
    in_emb = model.in_embed[input_labels]
    pos_emb = model.out_embed[pos_labels]
    neg_emb = model.out_embed[neg_labels]
    log_pos = jnp.einsum('bpe,be->bp', pos_emb, in_emb)
    log_neg = jnp.einsum('bne,be->bn', neg_emb, -in_emb)
    log_pos = jnp.sum(jax.nn.log_sigmoid(log_pos), axis=1)
    log_neg = jnp.sum(jax.nn.log_sigmoid(log_neg), axis=1)
    return -(log_pos + log_neg)


if __name__ == "__main__":
    key = jax.random.PRNGKey(0)
    k_model, k_in, k_pos, k_neg = jax.random.split(key, 4)

    vocab_size = 50
    embed_size = 32
    batch = 4
    c = 3              # context half-window -> P = 2*c
    K = 5              # negatives per positive -> N = 2*c*K
    P = 2 * c
    N = 2 * c * K

    model = EmbeddingModel(vocab_size, embed_size, k_model)

    input_labels = jax.random.randint(k_in, (batch,), 0, vocab_size)
    pos_labels = jax.random.randint(k_pos, (batch, P), 0, vocab_size)
    neg_labels = jax.random.randint(k_neg, (batch, N), 0, vocab_size)

    loss = model.forward(input_labels, pos_labels, neg_labels)
    loss = jax.block_until_ready(loss)

    ref = _reference_forward(model, input_labels, pos_labels, neg_labels)
    assert loss.shape == (batch,)
    assert jnp.allclose(loss, ref, atol=1e-5, rtol=1e-5), (loss, ref)

    print("KERNEL_OK")
</pallas_src>

<mosaic_0001>
module attributes {stable_mosaic.version = 11 : i64} {
  func.func @_sgns_loss_kernel(%arg0: i32, %arg1: memref<8x32xf32, #tpu.memory_space<vmem>>, %arg2: memref<8x36x32xf32, #tpu.memory_space<vmem>>, %arg3: memref<1x8xf32, #tpu.memory_space<vmem>>) attributes {dimension_semantics = [#tpu.dimension_semantics<parallel>], iteration_bounds = array<i64: 1>, scalar_prefetch = 0 : i64, scratch_operands = 0 : i64, tpu.core_type = #tpu.core_type<tc>, window_params = [{transform_indices = @transform_0, window_bounds = array<i64: 8, 32>}, {transform_indices = @transform_1, window_bounds = array<i64: 8, 36, 32>}, {transform_indices = @transform_2, window_bounds = array<i64: 1, 8>}]} {
    %c0 = arith.constant 0 : index
    %c0_0 = arith.constant 0 : index
    %0 = vector.load %arg1[%c0, %c0_0] : memref<8x32xf32, #tpu.memory_space<vmem>>, vector<8x32xf32>
    %c0_1 = arith.constant 0 : index
    %c0_2 = arith.constant 0 : index
    %c0_3 = arith.constant 0 : index
    %1 = vector.load %arg2[%c0_1, %c0_2, %c0_3] : memref<8x36x32xf32, #tpu.memory_space<vmem>>, vector<8x36x32xf32>
    %2 = vector.shape_cast %0 : vector<8x32xf32> to vector<8x1x32xf32>
    %3 = vector.broadcast %2 : vector<8x1x32xf32> to vector<8x36x32xf32>
    %4 = arith.mulf %1, %3 : vector<8x36x32xf32>
    %cst = arith.constant dense<0.000000e+00> : vector<8x36xf32>
    %5 = vector.multi_reduction <add>, %4, %cst [2] : vector<8x36x32xf32> to vector<8x36xf32>
    %6 = tpu.iota {dimensions = array<i32: 1>} : vector<8x36xi32>
    %c6_i32 = arith.constant 6 : i32
    %7 = vector.broadcast %c6_i32 : i32 to vector<8x36xi32>
    %8 = arith.cmpi slt, %6, %7 : vector<8x36xi32>
    %cst_4 = arith.constant 0.000000e+00 : f32
    %9 = vector.broadcast %cst_4 : f32 to vector<8x36xf32>
    %10 = arith.subf %9, %5 : vector<8x36xf32>
    %11 = arith.select %8, %5, %10 : vector<8x36xi1>, vector<8x36xf32>
    %cst_5 = arith.constant 0.000000e+00 : f32
    %12 = vector.broadcast %cst_5 : f32 to vector<8x36xf32>
    %13 = arith.minimumf %11, %12 : vector<8x36xf32>
    %14 = math.absf %11 : vector<8x36xf32>
    %cst_6 = arith.constant 0.000000e+00 : f32
    %15 = vector.broadcast %cst_6 : f32 to vector<8x36xf32>
    %16 = arith.subf %15, %14 : vector<8x36xf32>
    %17 = math.exp %16 : vector<8x36xf32>
    %18 = math.log1p %17 : vector<8x36xf32>
    %19 = arith.subf %13, %18 : vector<8x36xf32>
    %cst_7 = arith.constant dense<0.000000e+00> : vector<8xf32>
    %20 = vector.multi_reduction <add>, %19, %cst_7 [1] : vector<8x36xf32> to vector<8xf32>
    %cst_8 = arith.constant 0.000000e+00 : f32
    %21 = vector.broadcast %cst_8 : f32 to vector<8xf32>
    %22 = arith.subf %21, %20 : vector<8xf32>
    %23 = vector.shape_cast %22 : vector<8xf32> to vector<1x8xf32>
    %c0_9 = arith.constant 0 : index
    %c0_10 = arith.constant 0 : index
    %24 = vector.load %arg3[%c0_9, %c0_10] : memref<1x8xf32, #tpu.memory_space<vmem>>, vector<1x8xf32>
    tpu.vector_store %arg3[%c0_9, %c0_10], %23 {strides = array<i32>} : memref<1x8xf32, #tpu.memory_space<vmem>>, vector<1x8xf32>,
    return
  }
  func.func @transform_0(%arg0: i32) -> (i32, i32) {
    %c0_i32 = arith.constant 0 : i32
    %c0_i32_0 = arith.constant 0 : i32
    return %arg0, %c0_i32 : i32, i32
  }
  func.func @transform_1(%arg0: i32) -> (i32, i32, i32) {
    %c0_i32 = arith.constant 0 : i32
    %c0_i32_0 = arith.constant 0 : i32
    %c0_i32_1 = arith.constant 0 : i32
    return %arg0, %c0_i32, %c0_i32_0 : i32, i32, i32
  }
  func.func @transform_2(%arg0: i32) -> (i32, i32) {
    %c0_i32 = arith.constant 0 : i32
    %c0_i32_0 = arith.constant 0 : i32
    return %arg0, %c0_i32 : i32, i32
  }
}

</mosaic_0001>

<llo_original>
// kernel: tpu_custom_call.1
$region0: #{tpu_custom_call.1}
  #allocation0 [shape = 'u32[]', space=smem, size = 0x4, offset = 0x4, fixed_abs, tag = 'smem constant byte address 0x4 - core index']
  #allocation1 [shape = 'u32[144,128]{1,0:T(1,128)}', space=vmem, size = 0x12000, scoped, tag = 'internal scratch']
  %s0 = inlined_call_operand.vmem [shape: f32[8,32], index: 0, kind: input, shape index: {}]
  %s1 = inlined_call_operand.vmem [shape: f32[8,36,32], index: 1, kind: input, shape index: {}]
  %s2 = inlined_call_operand.hbm [shape: f32[1,8], index: 2, kind: output, shape index: {}]
  %s3 = sld [smem:[#allocation0]]
  $region18: #{tpu_custom_call.1} parent=0
    _
  %s5 = ssub.s32 1, %s3
  %s6 = scalar_select 0, %s5, %s3
  $region1: #{tpu_custom_call.1} parent=0
    #allocation2 [shape = 'u8[512]{0}', space=vmem, size = 0x400, scoped, tag = 'output window, operand 0, single buffered']
    #allocation3 [shape = 's32[1]{0}', space=sflag, size = 0x4, scoped, tag = 'scoped memory for tpu_custom_call.1']
    %7 = vsyncpa [#allocation3], 0
    // Predicated region
    $region2: #{tpu_custom_call.1} parent=1 // pred_check
      _
    $region3: #{tpu_custom_call.1} parent=1 // pred_check_branch
      %9 = sbr.rel (0) target = $region5
    $region4: #{tpu_custom_call.1} parent=1 // pred_region
      _
    $region5: #{tpu_custom_call.1} parent=1 // pred_fallthru
      _
    // Predicated region
    $region6: #{tpu_custom_call.1} parent=1 // pred_check
      _
    $region7: #{tpu_custom_call.1} parent=1 // pred_check_branch
      %11 = sbr.rel (0) target = $region9
    $region8: #{tpu_custom_call.1} parent=1 // pred_region
      _
    $region9: #{tpu_custom_call.1} parent=1 // pred_fallthru
      _
    %v12 = vld [vmem:[%s0] sm:$0xff]
    %v13 = vld [vmem:[%s1] sm:$0xff]
    %v14 = vld [vmem:[%s1 + $0x8] sm:$0xff]
    %v15 = vld [vmem:[%s1 + $0x10] sm:$0xff]
    %v16 = vld [vmem:[%s1 + $0x18] sm:$0xff]
    %v17 = vld [vmem:[%s1 + $0x20] sm:$0xf]
    %v18 = vld [vmem:[%s1 + $0x28] sm:$0xff]
    %v19 = vld [vmem:[%s1 + $0x30] sm:$0xff]
    %v20 = vld [vmem:[%s1 + $0x38] sm:$0xff]
    %v21 = vld [vmem:[%s1 + $0x40] sm:$0xff]
    %v22 = vld [vmem:[%s1 + $0x48] sm:$0xf]
    %v23 = vld [vmem:[%s1 + $0x50] sm:$0xff]
    %v24 = vld [vmem:[%s1 + $0x58] sm:$0xff]
    %v25 = vld [vmem:[%s1 + $0x60] sm:$0xff]
    %v26 = vld [vmem:[%s1 + $0x68] sm:$0xff]
    %v27 = vld [vmem:[%s1 + $0x70] sm:$0xf]
    %v28 = vld [vmem:[%s1 + $0x78] sm:$0xff]
    %v29 = vld [vmem:[%s1 + $0x80] sm:$0xff]
    %v30 = vld [vmem:[%s1 + $0x88] sm:$0xff]
    %v31 = vld [vmem:[%s1 + $0x90] sm:$0xff]
    %v32 = vld [vmem:[%s1 + $0x98] sm:$0xf]
    %v33 = vld [vmem:[%s1 + $0xa0] sm:$0xff]
    %v34 = vld [vmem:[%s1 + $0xa8] sm:$0xff]
    %v35 = vld [vmem:[%s1 + $0xb0] sm:$0xff]
    %v36 = vld [vmem:[%s1 + $0xb8] sm:$0xff]
    %v37 = vld [vmem:[%s1 + $0xc0] sm:$0xf]
    %v38 = vld [vmem:[%s1 + $0xc8] sm:$0xff]
    %v39 = vld [vmem:[%s1 + $0xd0] sm:$0xff]
    %v40 = vld [vmem:[%s1 + $0xd8] sm:$0xff]
    %v41 = vld [vmem:[%s1 + $0xe0] sm:$0xff]
    %v42 = vld [vmem:[%s1 + $0xe8] sm:$0xf]
    %v43 = vld [vmem:[%s1 + $0xf0] sm:$0xff]
    %v44 = vld [vmem:[%s1 + $0xf8] sm:$0xff]
    %v45 = vld [vmem:[%s1 + $0x100] sm:$0xff]
    %v46 = vld [vmem:[%s1 + $0x108] sm:$0xff]
    %v47 = vld [vmem:[%s1 + $0x110] sm:$0xf]
    %v48 = vld [vmem:[%s1 + $0x118] sm:$0xff]
    %v49 = vld [vmem:[%s1 + $0x120] sm:$0xff]
    %v50 = vld [vmem:[%s1 + $0x128] sm:$0xff]
    %v51 = vld [vmem:[%s1 + $0x130] sm:$0xff]
    %v52 = vld [vmem:[%s1 + $0x138] sm:$0xf]
    %v54 = vcombine.high %v12, %v12
    %v56 = vunpack.c.l.s4 1966171168
    %v57 = vunpack.c.0.s8 %v56
    %v58 = vlaneseq
    %v59 = vshrl.u32 %v58, 7
    %v60 = vsub.s32 %v57, %v59
    %v61 = vrot.slane %v12, %v60
    %v63 = vunpack.c.l.s4 1966171168
    %v64 = vunpack.c.0.s8 %v63
    %v65 = vlaneseq
    %v66 = vshrl.u32 %v65, 7
    %v67 = vsub.s32 %v64, %v66
    %v68 = vrot.slane %v54, %v67
    %v69 = vcombine.high %v61, %v61
    %v70 = vcombine.high %v68, %v68
    %v72 = vunpack.c.l.s4 1966171168
    %v73 = vunpack.c.0.s8 %v72
    %v74 = vlaneseq
    %v75 = vshrl.u32 %v74, 7
    %v76 = vsub.s32 %v73, %v75
    %v77 = vrot.slane %v61, %v76
    %v79 = vunpack.c.l.s4 1966171168
    %v80 = vunpack.c.0.s8 %v79
    %v81 = vlaneseq
    %v82 = vshrl.u32 %v81, 7
    %v83 = vsub.s32 %v80, %v82
    %v84 = vrot.slane %v68, %v83
    %v86 = vunpack.c.l.s4 1966171168
    %v87 = vunpack.c.0.s8 %v86
    %v88 = vlaneseq
    %v89 = vshrl.u32 %v88, 7
    %v90 = vsub.s32 %v87, %v89
    %v91 = vrot.slane %v69, %v90
    %v93 = vunpack.c.l.s4 1966171168
    %v94 = vunpack.c.0.s8 %v93
    %v95 = vlaneseq
    %v96 = vshrl.u32 %v95, 7
    %v97 = vsub.s32 %v94, %v96
    %v98 = vrot.slane %v70, %v97
    %v99 = vcombine.high %v77, %v77
    %v100 = vcombine.high %v84, %v84
    %v101 = vcombine.high %v91, %v91
    %v102 = vcombine.high %v98, %v98
    %v103 = vlaneseq
    %v104 = vshrl.u32 %v103, 7
    %v105 = vsub.s32 0, %v104
    %v106 = vrot.slane %v77, %v105
    %v107 = vlaneseq
    %v108 = vshrl.u32 %v107, 7
    %v109 = vsub.s32 0, %v108
    %v110 = vrot.slane %v91, %v109
    %v111 = vlaneseq
    %v112 = vshrl.u32 %v111, 7
    %v113 = vsub.s32 0, %v112
    %v114 = vrot.slane %v99, %v113
    %v115 = vlaneseq
    %v116 = vshrl.u32 %v115, 7
    %v117 = vsub.s32 0, %v116
    %v118 = vrot.slane %v101, %v117
    %v119 = vlaneseq
    %v120 = vshrl.u32 %v119, 7
    %v121 = vsub.s32 0, %v120
    %v122 = vrot.slane %v84, %v121
    %v123 = vlaneseq
    %v124 = vshrl.u32 %v123, 7
    %v125 = vsub.s32 0, %v124
    %v126 = vrot.slane %v98, %v125
    %v127 = vlaneseq
    %v128 = vshrl.u32 %v127, 7
    %v129 = vsub.s32 0, %v128
    %v130 = vrot.slane %v100, %v129
    %v131 = vlaneseq
    %v132 = vshrl.u32 %v131, 7
    %v133 = vsub.s32 0, %v132
    %v134 = vrot.slane %v102, %v133
    %v143 = vmul.f32 %v13, %v106
    %v144 = vmul.f32 %v14, %v106
    %v145 = vmul.f32 %v15, %v106
    %v146 = vmul.f32 %v16, %v106
    %v147 = vmul.f32 %v17, %v106
    %v148 = vmul.f32 %v18, %v110
    %v149 = vmul.f32 %v19, %v110
    %v150 = vmul.f32 %v20, %v110
    %v151 = vmul.f32 %v21, %v110
    %v152 = vmul.f32 %v22, %v110
    %v153 = vmul.f32 %v23, %v114
    %v154 = vmul.f32 %v24, %v114
    %v155 = vmul.f32 %v25, %v114
    %v156 = vmul.f32 %v26, %v114
    %v157 = vmul.f32 %v27, %v114
    %v158 = vmul.f32 %v28, %v118
    %v159 = vmul.f32 %v29, %v118
    %v160 = vmul.f32 %v30, %v118
    %v161 = vmul.f32 %v31, %v118
    %v162 = vmul.f32 %v32, %v118
    %v163 = vmul.f32 %v33, %v122
    %v164 = vmul.f32 %v34, %v122
    %v165 = vmul.f32 %v35, %v122
    %v166 = vmul.f32 %v36, %v122
    %v167 = vmul.f32 %v37, %v122
    %v168 = vmul.f32 %v38, %v126
    %v169 = vmul.f32 %v39, %v126
    %v170 = vmul.f32 %v40, %v126
    %v171 = vmul.f32 %v41, %v126
    %v172 = vmul.f32 %v42, %v126
    %v173 = vmul.f32 %v43, %v130
    %v174 = vmul.f32 %v44, %v130
    %v175 = vmul.f32 %v45, %v130
    %v176 = vmul.f32 %v46, %v130
    %v177 = vmul.f32 %v47, %v130
    %v178 = vmul.f32 %v48, %v134
    %v179 = vmul.f32 %v49, %v134
    %v180 = vmul.f32 %v50, %v134
    %v181 = vmul.f32 %v51, %v134
    %v182 = vmul.f32 %v52, %v134
    %vm183 = vcmask 261120
    %v184 = vsel %vm183, %v143, 0.0
    %185 = vadd.xlane.f32.xlu0 %v184
    %v186 = vpop.xlane.xlu0 %185
    %v187 = vsel %vm183, %v144, 0.0
    %188 = vadd.xlane.f32.xlu0 %v187
    %v189 = vpop.xlane.xlu0 %188
    %v190 = vsel %vm183, %v145, 0.0
    %191 = vadd.xlane.f32.xlu0 %v190
    %v192 = vpop.xlane.xlu0 %191
    %v193 = vsel %vm183, %v146, 0.0
    %194 = vadd.xlane.f32.xlu0 %v193
    %v195 = vpop.xlane.xlu0 %194
    %vm196 = vcmask 257024
    %v197 = vsel %vm196, %v147, 0.0
    %198 = vadd.xlane.f32.xlu0 %v197
    %v199 = vpop.xlane.xlu0 %198
    %v200 = vsel %vm183, %v148, 0.0
    %201 = vadd.xlane.f32.xlu0 %v200
    %v202 = vpop.xlane.xlu0 %201
    %v203 = vsel %vm183, %v149, 0.0
    %204 = vadd.xlane.f32.xlu0 %v203
    %v205 = vpop.xlane.xlu0 %204
    %v206 = vsel %vm183, %v150, 0.0
    %207 = vadd.xlane.f32.xlu0 %v206
    %v208 = vpop.xlane.xlu0 %207
    %v209 = vsel %vm183, %v151, 0.0
    %210 = vadd.xlane.f32.xlu0 %v209
    %v211 = vpop.xlane.xlu0 %210
    %v212 = vsel %vm196, %v152, 0.0
    %213 = vadd.xlane.f32.xlu0 %v212
    %v214 = vpop.xlane.xlu0 %213
    %v215 = vsel %vm183, %v153, 0.0
    %216 = vadd.xlane.f32.xlu0 %v215
    %v217 = vpop.xlane.xlu0 %216
    %v218 = vsel %vm183, %v154, 0.0
    %219 = vadd.xlane.f32.xlu0 %v218
    %v220 = vpop.xlane.xlu0 %219
    %v221 = vsel %vm183, %v155, 0.0
    %222 = vadd.xlane.f32.xlu0 %v221
    %v223 = vpop.xlane.xlu0 %222
    %v224 = vsel %vm183, %v156, 0.0
    %225 = vadd.xlane.f32.xlu0 %v224
    %v226 = vpop.xlane.xlu0 %225
    %v227 = vsel %vm196, %v157, 0.0
    %228 = vadd.xlane.f32.xlu0 %v227
    %v229 = vpop.xlane.xlu0 %228
    %v230 = vsel %vm183, %v158, 0.0
    %231 = vadd.xlane.f32.xlu0 %v230
    %v232 = vpop.xlane.xlu0 %231
    %v233 = vsel %vm183, %v159, 0.0
    %234 = vadd.xlane.f32.xlu0 %v233
    %v235 = vpop.xlane.xlu0 %234
    %v236 = vsel %vm183, %v160, 0.0
    %237 = vadd.xlane.f32.xlu0 %v236
    %v238 = vpop.xlane.xlu0 %237
    %v239 = vsel %vm183, %v161, 0.0
    %240 = vadd.xlane.f32.xlu0 %v239
    %v241 = vpop.xlane.xlu0 %240
    %v242 = vsel %vm196, %v162, 0.0
    %243 = vadd.xlane.f32.xlu0 %v242
    %v244 = vpop.xlane.xlu0 %243
    %v245 = vsel %vm183, %v163, 0.0
    %246 = vadd.xlane.f32.xlu0 %v245
    %v247 = vpop.xlane.xlu0 %246
    %v248 = vsel %vm183, %v164, 0.0
    %249 = vadd.xlane.f32.xlu0 %v248
    %v250 = vpop.xlane.xlu0 %249
    %v251 = vsel %vm183, %v165, 0.0
    %252 = vadd.xlane.f32.xlu0 %v251
    %v253 = vpop.xlane.xlu0 %252
    %v254 = vsel %vm183, %v166, 0.0
    %255 = vadd.xlane.f32.xlu0 %v254
    %v256 = vpop.xlane.xlu0 %255
    %v257 = vsel %vm196, %v167, 0.0
    %258 = vadd.xlane.f32.xlu0 %v257
    %v259 = vpop.xlane.xlu0 %258
    %v260 = vsel %vm183, %v168, 0.0
    %261 = vadd.xlane.f32.xlu0 %v260
    %v262 = vpop.xlane.xlu0 %261
    %v263 = vsel %vm183, %v169, 0.0
    %264 = vadd.xlane.f32.xlu0 %v263
    %v265 = vpop.xlane.xlu0 %264
    %v266 = vsel %vm183, %v170, 0.0
    %267 = vadd.xlane.f32.xlu0 %v266
    %v268 = vpop.xlane.xlu0 %267
    %v269 = vsel %vm183, %v171, 0.0
    %270 = vadd.xlane.f32.xlu0 %v269
    %v271 = vpop.xlane.xlu0 %270
    %v272 = vsel %vm196, %v172, 0.0
    %273 = vadd.xlane.f32.xlu0 %v272
    %v274 = vpop.xlane.xlu0 %273
    %v275 = vsel %vm183, %v173, 0.0
    %276 = vadd.xlane.f32.xlu0 %v275
    %v277 = vpop.xlane.xlu0 %276
    %v278 = vsel %vm183, %v174, 0.0
    %279 = vadd.xlane.f32.xlu0 %v278
    %v280 = vpop.xlane.xlu0 %279
    %v281 = vsel %vm183, %v175, 0.0
    %282 = vadd.xlane.f32.xlu0 %v281
    %v283 = vpop.xlane.xlu0 %282
    %v284 = vsel %vm183, %v176, 0.0
    %285 = vadd.xlane.f32.xlu0 %v284
    %v286 = vpop.xlane.xlu0 %285
    %v287 = vsel %vm196, %v177, 0.0
    %288 = vadd.xlane.f32.xlu0 %v287
    %v289 = vpop.xlane.xlu0 %288
    %v290 = vsel %vm183, %v178, 0.0
    %291 = vadd.xlane.f32.xlu0 %v290
    %v292 = vpop.xlane.xlu0 %291
    %v293 = vsel %vm183, %v179, 0.0
    %294 = vadd.xlane.f32.xlu0 %v293
    %v295 = vpop.xlane.xlu0 %294
    %v296 = vsel %vm183, %v180, 0.0
    %297 = vadd.xlane.f32.xlu0 %v296
    %v298 = vpop.xlane.xlu0 %297
    %v299 = vsel %vm183, %v181, 0.0
    %300 = vadd.xlane.f32.xlu0 %v299
    %v301 = vpop.xlane.xlu0 %300
    %v302 = vsel %vm196, %v182, 0.0
    %303 = vadd.xlane.f32.xlu0 %v302
    %v304 = vpop.xlane.xlu0 %303
    %v305 = vlaneseq
    %v306 = vand.u32 %v305, 127
    %vm307 = vcmp.lt.s32.totalorder %v306, 6
    %v308 = vsub.f32 0.0, %v186
    %v309 = vsub.f32 0.0, %v189
    %v310 = vsub.f32 0.0, %v192
    %v311 = vsub.f32 0.0, %v195
    %v312 = vsub.f32 0.0, %v199
    %v313 = vsub.f32 0.0, %v202
    %v314 = vsub.f32 0.0, %v205
    %v315 = vsub.f32 0.0, %v208
    %v316 = vsub.f32 0.0, %v211
    %v317 = vsub.f32 0.0, %v214
    %v318 = vsub.f32 0.0, %v217
    %v319 = vsub.f32 0.0, %v220
    %v320 = vsub.f32 0.0, %v223
    %v321 = vsub.f32 0.0, %v226
    %v322 = vsub.f32 0.0, %v229
    %v323 = vsub.f32 0.0, %v232
    %v324 = vsub.f32 0.0, %v235
    %v325 = vsub.f32 0.0, %v238
    %v326 = vsub.f32 0.0, %v241
    %v327 = vsub.f32 0.0, %v244
    %v328 = vsub.f32 0.0, %v247
    %v329 = vsub.f32 0.0, %v250
    %v330 = vsub.f32 0.0, %v253
    %v331 = vsub.f32 0.0, %v256
    %v332 = vsub.f32 0.0, %v259
    %v333 = vsub.f32 0.0, %v262
    %v334 = vsub.f32 0.0, %v265
    %v335 = vsub.f32 0.0, %v268
    %v336 = vsub.f32 0.0, %v271
    %v337 = vsub.f32 0.0, %v274
    %v338 = vsub.f32 0.0, %v277
    %v339 = vsub.f32 0.0, %v280
    %v340 = vsub.f32 0.0, %v283
    %v341 = vsub.f32 0.0, %v286
    %v342 = vsub.f32 0.0, %v289
    %v343 = vsub.f32 0.0, %v292
    %v344 = vsub.f32 0.0, %v295
    %v345 = vsub.f32 0.0, %v298
    %v346 = vsub.f32 0.0, %v301
    %v347 = vsub.f32 0.0, %v304
    %v388 = vlaneseq
    %v389 = vshrl.u32 %v388, 7
    %v390 = vsub.s32 %v306, %v389
    %v391 = vrot.slane %v186, %v390
    %v392 = vadd.s32 %v306, 4294967288
    %v393 = vlaneseq
    %v394 = vshrl.u32 %v393, 7
    %v395 = vsub.s32 %v392, %v394
    %v396 = vrot.slane %v189, %v395
    %vm397 = vcmask 130112
    %v398 = vsel %vm397, %v396, %v391
    %v399 = vadd.s32 %v306, 4294967280
    %v400 = vlaneseq
    %v401 = vshrl.u32 %v400, 7
    %v402 = vsub.s32 %v399, %v401
    %v403 = vrot.slane %v192, %v402
    %vm404 = vcmask 195712
    %v405 = vsel %vm404, %v403, %v398
    %v406 = vadd.s32 %v306, 4294967272
    %v407 = vlaneseq
    %v408 = vshrl.u32 %v407, 7
    %v409 = vsub.s32 %v406, %v408
    %v410 = vrot.slane %v195, %v409
    %vm411 = vcmask 261312
    %v412 = vsel %vm411, %v410, %v405
    %v413 = vadd.s32 %v306, 4294967264
    %v414 = vlaneseq
    %v415 = vshrl.u32 %v414, 7
    %v416 = vsub.s32 %v413, %v415
    %v417 = vrot.slane %v199, %v416
    %vm418 = vcmask 326912
    %v419 = vsel %vm418, %v417, %v412
    %v420 = vlaneseq
    %v421 = vshrl.u32 %v420, 7
    %v422 = vsub.s32 %v306, %v421
    %v423 = vrot.slane %v202, %v422
    %v424 = vlaneseq
    %v425 = vshrl.u32 %v424, 7
    %v426 = vsub.s32 %v392, %v425
    %v427 = vrot.slane %v205, %v426
    %v428 = vsel %vm397, %v427, %v423
    %v429 = vlaneseq
    %v430 = vshrl.u32 %v429, 7
    %v431 = vsub.s32 %v399, %v430
    %v432 = vrot.slane %v208, %v431
    %v433 = vsel %vm404, %v432, %v428
    %v434 = vlaneseq
    %v435 = vshrl.u32 %v434, 7
    %v436 = vsub.s32 %v406, %v435
    %v437 = vrot.slane %v211, %v436
    %v438 = vsel %vm411, %v437, %v433
    %v439 = vlaneseq
    %v440 = vshrl.u32 %v439, 7
    %v441 = vsub.s32 %v413, %v440
    %v442 = vrot.slane %v214, %v441
    %v443 = vsel %vm418, %v442, %v438
    %v444 = vlaneseq
    %v445 = vshrl.u32 %v444, 7
    %v446 = vsub.s32 %v306, %v445
    %v447 = vrot.slane %v217, %v446
    %v448 = vlaneseq
    %v449 = vshrl.u32 %v448, 7
    %v450 = vsub.s32 %v392, %v449
    %v451 = vrot.slane %v220, %v450
    %v452 = vsel %vm397, %v451, %v447
    %v453 = vlaneseq
    %v454 = vshrl.u32 %v453, 7
    %v455 = vsub.s32 %v399, %v454
    %v456 = vrot.slane %v223, %v455
    %v457 = vsel %vm404, %v456, %v452
    %v458 = vlaneseq
    %v459 = vshrl.u32 %v458, 7
    %v460 = vsub.s32 %v406, %v459
    %v461 = vrot.slane %v226, %v460
    %v462 = vsel %vm411, %v461, %v457
    %v463 = vlaneseq
    %v464 = vshrl.u32 %v463, 7
    %v465 = vsub.s32 %v413, %v464
    %v466 = vrot.slane %v229, %v465
    %v467 = vsel %vm418, %v466, %v462
    %v468 = vlaneseq
    %v469 = vshrl.u32 %v468, 7
    %v470 = vsub.s32 %v306, %v469
    %v471 = vrot.slane %v232, %v470
    %v472 = vlaneseq
    %v473 = vshrl.u32 %v472, 7
    %v474 = vsub.s32 %v392, %v473
    %v475 = vrot.slane %v235, %v474
    %v476 = vsel %vm397, %v475, %v471
    %v477 = vlaneseq
    %v478 = vshrl.u32 %v477, 7
    %v479 = vsub.s32 %v399, %v478
    %v480 = vrot.slane %v238, %v479
    %v481 = vsel %vm404, %v480, %v476
    %v482 = vlaneseq
    %v483 = vshrl.u32 %v482, 7
    %v484 = vsub.s32 %v406, %v483
    %v485 = vrot.slane %v241, %v484
    %v486 = vsel %vm411, %v485, %v481
    %v487 = vlaneseq
    %v488 = vshrl.u32 %v487, 7
    %v489 = vsub.s32 %v413, %v488
    %v490 = vrot.slane %v244, %v489
    %v491 = vsel %vm418, %v490, %v486
    %v492 = vlaneseq
    %v493 = vshrl.u32 %v492, 7
    %v494 = vsub.s32 %v306, %v493
    %v495 = vrot.slane %v247, %v494
    %v496 = vlaneseq
    %v497 = vshrl.u32 %v496, 7
    %v498 = vsub.s32 %v392, %v497
    %v499 = vrot.slane %v250, %v498
    %v500 = vsel %vm397, %v499, %v495
    %v501 = vlaneseq
    %v502 = vshrl.u32 %v501, 7
    %v503 = vsub.s32 %v399, %v502
    %v504 = vrot.slane %v253, %v503
    %v505 = vsel %vm404, %v504, %v500
    %v506 = vlaneseq
    %v507 = vshrl.u32 %v506, 7
    %v508 = vsub.s32 %v406, %v507
    %v509 = vrot.slane %v256, %v508
    %v510 = vsel %vm411, %v509, %v505
    %v511 = vlaneseq
    %v512 = vshrl.u32 %v511, 7
    %v513 = vsub.s32 %v413, %v512
    %v514 = vrot.slane %v259, %v513
    %v515 = vsel %vm418, %v514, %v510
    %v516 = vlaneseq
    %v517 = vshrl.u32 %v516, 7
    %v518 = vsub.s32 %v306, %v517
    %v519 = vrot.slane %v262, %v518
    %v520 = vlaneseq
    %v521 = vshrl.u32 %v520, 7
    %v522 = vsub.s32 %v392, %v521
    %v523 = vrot.slane %v265, %v522
    %v524 = vsel %vm397, %v523, %v519
    %v525 = vlaneseq
    %v526 = vshrl.u32 %v525, 7
    %v527 = vsub.s32 %v399, %v526
    %v528 = vrot.slane %v268, %v527
    %v529 = vsel %vm404, %v528, %v524
    %v530 = vlaneseq
    %v531 = vshrl.u32 %v530, 7
    %v532 = vsub.s32 %v406, %v531
    %v533 = vrot.slane %v271, %v532
    %v534 = vsel %vm411, %v533, %v529
    %v535 = vlaneseq
    %v536 = vshrl.u32 %v535, 7
    %v537 = vsub.s32 %v413, %v536
    %v538 = vrot.slane %v274, %v537
    %v539 = vsel %vm418, %v538, %v534
    %v540 = vlaneseq
    %v541 = vshrl.u32 %v540, 7
    %v542 = vsub.s32 %v306, %v541
    %v543 = vrot.slane %v277, %v542
    %v544 = vlaneseq
    %v545 = vshrl.u32 %v544, 7
    %v546 = vsub.s32 %v392, %v545
    %v547 = vrot.slane %v280, %v546
    %v548 = vsel %vm397, %v547, %v543
    %v549 = vlaneseq
    %v550 = vshrl.u32 %v549, 7
    %v551 = vsub.s32 %v399, %v550
    %v552 = vrot.slane %v283, %v551
    %v553 = vsel %vm404, %v552, %v548
    %v554 = vlaneseq
    %v555 = vshrl.u32 %v554, 7
    %v556 = vsub.s32 %v406, %v555
    %v557 = vrot.slane %v286, %v556
    %v558 = vsel %vm411, %v557, %v553
    %v559 = vlaneseq
    %v560 = vshrl.u32 %v559, 7
    %v561 = vsub.s32 %v413, %v560
    %v562 = vrot.slane %v289, %v561
    %v563 = vsel %vm418, %v562, %v558
    %v564 = vlaneseq
    %v565 = vshrl.u32 %v564, 7
    %v566 = vsub.s32 %v306, %v565
    %v567 = vrot.slane %v292, %v566
    %v568 = vlaneseq
    %v569 = vshrl.u32 %v568, 7
    %v570 = vsub.s32 %v392, %v569
    %v571 = vrot.slane %v295, %v570
    %v572 = vsel %vm397, %v571, %v567
    %v573 = vlaneseq
    %v574 = vshrl.u32 %v573, 7
    %v575 = vsub.s32 %v399, %v574
    %v576 = vrot.slane %v298, %v575
    %v577 = vsel %vm404, %v576, %v572
    %v578 = vlaneseq
    %v579 = vshrl.u32 %v578, 7
    %v580 = vsub.s32 %v406, %v579
    %v581 = vrot.slane %v301, %v580
    %v582 = vsel %vm411, %v581, %v577
    %v583 = vlaneseq
    %v584 = vshrl.u32 %v583, 7
    %v585 = vsub.s32 %v413, %v584
    %v586 = vrot.slane %v304, %v585
    %v587 = vsel %vm418, %v586, %v582
    %vm588 = vcmask 1041409
    %v589 = vsel %vm588, %v443, %v419
    %vm590 = vcmask 1042434
    %v591 = vsel %vm590, %v467, %v589
    %vm592 = vcmask 1043459
    %v593 = vsel %vm592, %v491, %v591
    %vm594 = vcmask 1044484
    %v595 = vsel %vm594, %v515, %v593
    %vm596 = vcmask 1045509
    %v597 = vsel %vm596, %v539, %v595
    %vm598 = vcmask 1046534
    %v599 = vsel %vm598, %v563, %v597
    %vm600 = vcmask 1047559
    %v601 = vsel %vm600, %v587, %v599
    %v643 = vlaneseq
    %v644 = vshrl.u32 %v643, 7
    %v645 = vsub.s32 %v306, %v644
    %v646 = vrot.slane %v308, %v645
    %v647 = vlaneseq
    %v648 = vshrl.u32 %v647, 7
    %v649 = vsub.s32 %v392, %v648
    %v650 = vrot.slane %v309, %v649
    %v651 = vsel %vm397, %v650, %v646
    %v652 = vlaneseq
    %v653 = vshrl.u32 %v652, 7
    %v654 = vsub.s32 %v399, %v653
    %v655 = vrot.slane %v310, %v654
    %v656 = vsel %vm404, %v655, %v651
    %v657 = vlaneseq
    %v658 = vshrl.u32 %v657, 7
    %v659 = vsub.s32 %v406, %v658
    %v660 = vrot.slane %v311, %v659
    %v661 = vsel %vm411, %v660, %v656
    %v662 = vlaneseq
    %v663 = vshrl.u32 %v662, 7
    %v664 = vsub.s32 %v413, %v663
    %v665 = vrot.slane %v312, %v664
    %v666 = vsel %vm418, %v665, %v661
    %v667 = vlaneseq
    %v668 = vshrl.u32 %v667, 7
    %v669 = vsub.s32 %v306, %v668
    %v670 = vrot.slane %v313, %v669
    %v671 = vlaneseq
    %v672 = vshrl.u32 %v671, 7
    %v673 = vsub.s32 %v392, %v672
    %v674 = vrot.slane %v314, %v673
    %v675 = vsel %vm397, %v674, %v670
    %v676 = vlaneseq
    %v677 = vshrl.u32 %v676, 7
    %v678 = vsub.s32 %v399, %v677
    %v679 = vrot.slane %v315, %v678
    %v680 = vsel %vm404, %v679, %v675
    %v681 = vlaneseq
    %v682 = vshrl.u32 %v681, 7
    %v683 = vsub.s32 %v406, %v682
    %v684 = vrot.slane %v316, %v683
    %v685 = vsel %vm411, %v684, %v680
    %v686 = vlaneseq
    %v687 = vshrl.u32 %v686, 7
    %v688 = vsub.s32 %v413, %v687
    %v689 = vrot.slane %v317, %v688
    %v690 = vsel %vm418, %v689, %v685
    %v691 = vlaneseq
    %v692 = vshrl.u32 %v691, 7
    %v693 = vsub.s32 %v306, %v692
    %v694 = vrot.slane %v318, %v693
    %v695 = vlaneseq
    %v696 = vshrl.u32 %v695, 7
    %v697 = vsub.s32 %v392, %v696
    %v698 = vrot.slane %v319, %v697
    %v699 = vsel %vm397, %v698, %v694
    %v700 = vlaneseq
    %v701 = vshrl.u32 %v700, 7
    %v702 = vsub.s32 %v399, %v701
    %v703 = vrot.slane %v320, %v702
    %v704 = vsel %vm404, %v703, %v699
    %v705 = vlaneseq
    %v706 = vshrl.u32 %v705, 7
    %v707 = vsub.s32 %v406, %v706
    %v708 = vrot.slane %v321, %v707
    %v709 = vsel %vm411, %v708, %v704
    %v710 = vlaneseq
    %v711 = vshrl.u32 %v710, 7
    %v712 = vsub.s32 %v413, %v711
    %v713 = vrot.slane %v322, %v712
    %v714 = vsel %vm418, %v713, %v709
    %v715 = vlaneseq
    %v716 = vshrl.u32 %v715, 7
    %v717 = vsub.s32 %v306, %v716
    %v718 = vrot.slane %v323, %v717
    %v719 = vlaneseq
    %v720 = vshrl.u32 %v719, 7
    %v721 = vsub.s32 %v392, %v720
    %v722 = vrot.slane %v324, %v721
    %v723 = vsel %vm397, %v722, %v718
    %v724 = vlaneseq
    %v725 = vshrl.u32 %v724, 7
    %v726 = vsub.s32 %v399, %v725
    %v727 = vrot.slane %v325, %v726
    %v728 = vsel %vm404, %v727, %v723
    %v729 = vlaneseq
    %v730 = vshrl.u32 %v729, 7
    %v731 = vsub.s32 %v406, %v730
    %v732 = vrot.slane %v326, %v731
    %v733 = vsel %vm411, %v732, %v728
    %v734 = vlaneseq
    %v735 = vshrl.u32 %v734, 7
    %v736 = vsub.s32 %v413, %v735
    %v737 = vrot.slane %v327, %v736
    %v738 = vsel %vm418, %v737, %v733
    %v739 = vlaneseq
    %v740 = vshrl.u32 %v739, 7
    %v741 = vsub.s32 %v306, %v740
    %v742 = vrot.slane %v328, %v741
    %v743 = vlaneseq
    %v744 = vshrl.u32 %v743, 7
    %v745 = vsub.s32 %v392, %v744
    %v746 = vrot.slane %v329, %v745
    %v747 = vsel %vm397, %v746, %v742
    %v748 = vlaneseq
    %v749 = vshrl.u32 %v748, 7
    %v750 = vsub.s32 %v399, %v749
    %v751 = vrot.slane %v330, %v750
    %v752 = vsel %vm404, %v751, %v747
    %v753 = vlaneseq
    %v754 = vshrl.u32 %v753, 7
    %v755 = vsub.s32 %v406, %v754
    %v756 = vrot.slane %v331, %v755
    %v757 = vsel %vm411, %v756, %v752
    %v758 = vlaneseq
    %v759 = vshrl.u32 %v758, 7
    %v760 = vsub.s32 %v413, %v759
    %v761 = vrot.slane %v332, %v760
    %v762 = vsel %vm418, %v761, %v757
    %v763 = vlaneseq
    %v764 = vshrl.u32 %v763, 7
    %v765 = vsub.s32 %v306, %v764
    %v766 = vrot.slane %v333, %v765
    %v767 = vlaneseq
    %v768 = vshrl.u32 %v767, 7
    %v769 = vsub.s32 %v392, %v768
    %v770 = vrot.slane %v334, %v769
    %v771 = vsel %vm397, %v770, %v766
    %v772 = vlaneseq
    %v773 = vshrl.u32 %v772, 7
    %v774 = vsub.s32 %v399, %v773
    %v775 = vrot.slane %v335, %v774
    %v776 = vsel %vm404, %v775, %v771
    %v777 = vlaneseq
    %v778 = vshrl.u32 %v777, 7
    %v779 = vsub.s32 %v406, %v778
    %v780 = vrot.slane %v336, %v779
    %v781 = vsel %vm411, %v780, %v776
    %v782 = vlaneseq
    %v783 = vshrl.u32 %v782, 7
    %v784 = vsub.s32 %v413, %v783
    %v785 = vrot.slane %v337, %v784
    %v786 = vsel %vm418, %v785, %v781
    %v787 = vlaneseq
    %v788 = vshrl.u32 %v787, 7
    %v789 = vsub.s32 %v306, %v788
    %v790 = vrot.slane %v338, %v789
    %v791 = vlaneseq
    %v792 = vshrl.u32 %v791, 7
    %v793 = vsub.s32 %v392, %v792
    %v794 = vrot.slane %v339, %v793
    %v795 = vsel %vm397, %v794, %v790
    %v796 = vlaneseq
    %v797 = vshrl.u32 %v796, 7
    %v798 = vsub.s32 %v399, %v797
    %v799 = vrot.slane %v340, %v798
    %v800 = vsel %vm404, %v799, %v795
    %v801 = vlaneseq
    %v802 = vshrl.u32 %v801, 7
    %v803 = vsub.s32 %v406, %v802
    %v804 = vrot.slane %v341, %v803
    %v805 = vsel %vm411, %v804, %v800
    %v806 = vlaneseq
    %v807 = vshrl.u32 %v806, 7
    %v808 = vsub.s32 %v413, %v807
    %v809 = vrot.slane %v342, %v808
    %v810 = vsel %vm418, %v809, %v805
    %v811 = vlaneseq
    %v812 = vshrl.u32 %v811, 7
    %v813 = vsub.s32 %v306, %v812
    %v814 = vrot.slane %v343, %v813
    %v815 = vlaneseq
    %v816 = vshrl.u32 %v815, 7
    %v817 = vsub.s32 %v392, %v816
    %v818 = vrot.slane %v344, %v817
    %v819 = vsel %vm397, %v818, %v814
    %v820 = vlaneseq
    %v821 = vshrl.u32 %v820, 7
    %v822 = vsub.s32 %v399, %v821
    %v823 = vrot.slane %v345, %v822
    %v824 = vsel %vm404, %v823, %v819
    %v825 = vlaneseq
    %v826 = vshrl.u32 %v825, 7
    %v827 = vsub.s32 %v406, %v826
    %v828 = vrot.slane %v346, %v827
    %v829 = vsel %vm411, %v828, %v824
    %v830 = vlaneseq
    %v831 = vshrl.u32 %v830, 7
    %v832 = vsub.s32 %v413, %v831
    %v833 = vrot.slane %v347, %v832
    %v834 = vsel %vm418, %v833, %v829
    %v835 = vsel %vm588, %v690, %v666
    %v836 = vsel %vm590, %v714, %v835
    %v837 = vsel %vm592, %v738, %v836
    %v838 = vsel %vm594, %v762, %v837
    %v839 = vsel %vm596, %v786, %v838
    %v840 = vsel %vm598, %v810, %v839
    %v841 = vsel %vm600, %v834, %v840
    %v843 = vsel %vm307, %v601, %v841
    %v844 = vmin.f32 %v843, 0.0
    %v845 = vand.u32 2147483647, %v843
    %v846 = vsub.f32 0.0, %v845
    %v847 = vmul.f32 %v846, 1.442695
    %v848 = vpow.pop %v847
    %v849 = vadd.f32 %v848, 1.0
    %v850 = vlog2.pop %v849
    %v851 = vmul.f32 %v850, 0.6931472
    %v852 = vmul.f32 -0.5, %v848
    %v853 = vadd.f32 %v852, 1.0
    %v854 = vmul.f32 %v853, %v848
    %v855 = vand.u32 2147483647, %v848
    %vm856 = vcmp.lt.f32.partialorder %v855, 0.0004427343
    %v857 = vsel %vm856, %v854, %v851
    %v858 = vsub.f32 %v844, %v857
    %vm859 = vcmask 293888
    %v860 = vsel %vm859, %v858, 0.0
    %861 = vadd.xlane.f32.xlu0 %v860
    %v862 = vpop.xlane.xlu0 %861
    %v863 = vsub.f32 0.0, %v862
    %v865 = vlaneseq
    %v866 = vshrl.u32 %v865, 7
    %v867 = vsub.s32 %v306, %v866
    %v868 = vrot.slane %v863, %v867
    %vm870 = vcmask 57344
    %871 = vst.msk [vmem:[#allocation2] sm:$0x1] %vm870, %v868
    // Predicated region
    $region10: #{tpu_custom_call.1} parent=1 // pred_check
      _
    $region11: #{tpu_custom_call.1} parent=1 // pred_check_branch
      %873 = sbr.rel (0) target = $region13
    $region12: #{tpu_custom_call.1} parent=1 // pred_region
      %s875 = ssub.s32 16, 16
      %876 = vsyncadd [#allocation3], %s875
      %s878 = sshll.u32 [#allocation2], 4
      %s879 = int_to_ptr.vmem [resolvable:$true] %s878
      %881 = dma.vmem_to_hbm [thread:$0]  %s879, 16, %s2, [#allocation3]
    $region13: #{tpu_custom_call.1} parent=1 // pred_fallthru
      _
    // Predicated region
    $region14: #{tpu_custom_call.1} parent=1 // pred_check
      _
    $region15: #{tpu_custom_call.1} parent=1 // pred_check_branch
      %883 = sbr.rel (0) target = $region17
    $region16: #{tpu_custom_call.1} parent=1 // pred_region
      %884 = dma.done [#allocation3], 16
    $region17: #{tpu_custom_call.1} parent=1 // pred_fallthru
      _
    %885 = vsyncpa [#allocation3], 1

</llo_original>
